<compile_context>
chip_gen: v5e
topology: v5e:2x2
jax: 0.10.0
libtpu: 0.0.40
codegen_flags: <defaults>
</compile_context>

<pallas_src>
import functools

import jax
import jax.numpy as jnp
from jax.experimental import pallas as pl
from jax.experimental.pallas import tpu as pltpu


def _round_up(x, m):
    return ((x + m - 1) // m) * m


def _focal_tile(pred, tgt, w, *, gamma, alpha, scale, approx, row0, col0,
                num_rows, num_cols, mask_rows, mask_cols):
    """Focal loss (f32) for one (chunk, Cblk) sub-tile.

    pred: (chunk, Cblk) logits (native dtype), tgt: (chunk, 1) i32, w: (chunk, 1).
    Invalid rows/cols of edge tiles are masked with jnp.where BEFORE the
    transcendentals (OOB block data is undefined and must never reach exp/log1p).
    """
    pred = pred.astype(jnp.float32)
    cls = jax.lax.broadcasted_iota(jnp.int32, pred.shape, 1)
    if not (isinstance(col0, int) and col0 == 0):
        cls = cls + col0

    valid = None
    if mask_cols:
        valid = cls < num_cols
    if mask_rows:
        rows = row0 + jax.lax.broadcasted_iota(jnp.int32, pred.shape, 0)
        rmask = rows < num_rows
        valid = rmask if valid is None else jnp.logical_and(valid, rmask)
    if valid is not None:
        pred = jnp.where(valid, pred, 0.0)      # clamp garbage before exp/log1p

    is_t = cls == tgt                           # boolean one-hot (no float cast)

    # sigmoid via shared exp(-|x|); divide goes to the EUP slot.
    e = jnp.exp(-jnp.abs(pred))
    inv = pl.reciprocal(1.0 + e, approx=approx)
    p = jnp.where(pred >= 0.0, inv, 1.0 - inv)

    pt = jnp.where(is_t, 1.0 - p, p)
    g = float(gamma)
    if g == 0.0:
        mod = None                              # pt**0 == 1 (avoid 0**0 NaN)
    elif g == 1.0:
        mod = pt
    elif g == 2.0:
        mod = pt * pt
    elif g == int(g) and g > 0.0:
        mod = pt
        for _ in range(int(g) - 1):
            mod = mod * pt
    else:
        mod = jnp.maximum(pt, 1e-12) ** g       # clamp: pow lowers via log(pt)

    # loss_weight is folded into the compile-time alpha constants (free).
    aw = jnp.where(is_t, jnp.float32(alpha * scale),
                   jnp.float32((1.0 - alpha) * scale))
    focal_w = aw if mod is None else aw * mod

    # numerically-stable BCE-with-logits: max(x,0) - x*t + log1p(exp(-|x|))
    bce = jnp.maximum(pred, 0.0) - jnp.where(is_t, pred, 0.0) + jnp.log1p(e)

    loss = bce * focal_w * w.astype(jnp.float32)
    if valid is not None:
        loss = jnp.where(valid, loss, 0.0)      # zero garbage rows/cols (incl. NaN w)
    return loss


def _focal_sum_kernel(pred_ref, tgt_ref, w_ref, psum_ref, *, gamma, alpha, scale,
                      approx, num_rows, num_cols, tile_n, tile_c, chunk,
                      mask_rows, mask_cols, multi_c):
    col0 = pl.program_id(1) * tile_c if multi_c else 0
    row_base = pl.program_id(0) * tile_n
    num_chunks = tile_n // chunk

    def partial_sum(r0, rows):
        loss = _focal_tile(pred_ref[pl.ds(r0, rows), :],
                           tgt_ref[pl.ds(r0, rows), :],
                           w_ref[pl.ds(r0, rows), :],
                           gamma=gamma, alpha=alpha, scale=scale, approx=approx,
                           row0=row_base + r0, col0=col0,
                           num_rows=num_rows, num_cols=num_cols,
                           mask_rows=mask_rows, mask_cols=mask_cols)
        # VPU-only fold of the sublane axis into an (8, Cblk) slab.
        return loss.reshape(rows // 8, 8, loss.shape[1]).sum(axis=0)

    if num_chunks == 1:
        psum_ref[...] = partial_sum(0, tile_n)
    else:
        psum_ref[...] = jnp.zeros_like(psum_ref)

        @pl.loop(0, num_chunks)
        def _(ci):
            r0 = pl.multiple_of(ci * chunk, chunk)
            psum_ref[...] += partial_sum(r0, chunk)


def _focal_none_kernel(pred_ref, tgt_ref, w_ref, loss_ref, *, gamma, alpha, scale,
                       approx, num_rows, num_cols, tile_n, tile_c, chunk,
                       mask_rows, mask_cols, multi_c):
    col0 = pl.program_id(1) * tile_c if multi_c else 0
    row_base = pl.program_id(0) * tile_n
    num_chunks = tile_n // chunk

    def compute(r0, rows):
        return _focal_tile(pred_ref[pl.ds(r0, rows), :],
                           tgt_ref[pl.ds(r0, rows), :],
                           w_ref[pl.ds(r0, rows), :],
                           gamma=gamma, alpha=alpha, scale=scale, approx=approx,
                           row0=row_base + r0, col0=col0,
                           num_rows=num_rows, num_cols=num_cols,
                           mask_rows=mask_rows, mask_cols=mask_cols)

    if num_chunks == 1:
        loss_ref[...] = compute(0, tile_n).astype(loss_ref.dtype)
    else:
        @pl.loop(0, num_chunks)
        def _(ci):
            r0 = pl.multiple_of(ci * chunk, chunk)
            loss_ref[pl.ds(r0, chunk), :] = compute(r0, chunk).astype(loss_ref.dtype)


def sigmoid_focal_loss_pallas(pred, target, weight=None, *, gamma=2.0, alpha=0.25,
                              reduction="mean", avg_factor=None, loss_weight=1.0,
                              approx_reciprocal=True):
    """mmdet FocalLoss.forward (use_sigmoid=True) on TPU.

    pred: (N, C) float logits; target: (N,) int labels; weight: optional (N,).
    approx_reciprocal=True uses the EUP vrcp (fast path, small relative error);
    set False for results bit-faithful to an exact divide.
    """
    if pred.ndim != 2:
        raise ValueError("pred must be (N, C)")
    if reduction not in ("none", "mean", "sum"):
        raise ValueError(f"unsupported reduction: {reduction}")
    N, C = pred.shape
    if weight is None:
        weight = jnp.ones((N,), dtype=jnp.float32)
    tgt2 = target.astype(jnp.int32).reshape(N, 1)
    w2 = weight.reshape(N, 1)

    # ---- class (lane) tiling: never pad C in HBM; edge lanes are masked in-kernel.
    c_pad = _round_up(C, 128)
    if c_pad <= 2048:
        tile_c = C                      # full-extent block (legal even if C % 128 != 0)
        grid_c = 1
        mask_cols = False
    else:
        tile_c = 1024                   # 2nd grid axis over C (keeps v7x 64 MiB VMEM happy)
        grid_c = pl.cdiv(C, tile_c)
        mask_cols = (grid_c * tile_c != C)

    lane_c = _round_up(tile_c, 128)     # VMEM layout width of one block
    in_bytes = jnp.dtype(pred.dtype).itemsize
    out_row_bytes = lane_c * in_bytes if reduction == "none" else 0

    # ---- generation-aware VMEM budget (v5e/v6e: 128 MiB, v7x: 64 MiB per TC).
    try:
        vmem_cap = int(pltpu.get_tpu_info().vmem_capacity_bytes)
    except Exception:
        vmem_cap = 64 << 20             # conservative fallback (v7x per-TC)
    dma_budget = min(24 << 20, vmem_cap // 4)           # double-buffered block budget
    dma_row_bytes = 2 * (lane_c * in_bytes + 4 + 4 + out_row_bytes)

    rows8 = _round_up(N, 8)
    tile_n = dma_budget // max(1, dma_row_bytes)
    # >=2 grid steps (aim ~8) along rows so v7x's two TensorCores both get work,
    # while keeping tiles >=512 rows when possible to amortize per-step overhead.
    cap_steps = min(max(512, _round_up(pl.cdiv(rows8, 8), 8)),
                    _round_up(pl.cdiv(rows8, 2), 8))
    tile_n = min(tile_n, 2048, cap_steps, rows8)
    tile_n = max(8, (tile_n // 8) * 8)

    # Inner sub-chunk (~32K elems) bounds live f32 temporaries to a few MiB.
    chunk = max(8, min(256, ((32 * 1024) // lane_c) // 8 * 8, tile_n))
    tile_n = max(chunk, (tile_n // chunk) * chunk)
    grid_n = pl.cdiv(N, tile_n)
    mask_rows = (grid_n * tile_n != N)

    in_specs = [
        pl.BlockSpec((tile_n, tile_c), lambda i, j: (i, j)),   # pred (native dtype)
        pl.BlockSpec((tile_n, 1), lambda i, j: (i, 0)),        # target
        pl.BlockSpec((tile_n, 1), lambda i, j: (i, 0)),        # weight
    ]
    cparams = pltpu.CompilerParams(
        dimension_semantics=("parallel", "parallel"),
        vmem_limit_bytes=int(min(vmem_cap, 128 << 20) // 2))
    # TODO(synk): optionally pipeline_mode=pl.Buffered(3) on pred for v5e once the
    #             trimmed kernel is HBM-bound (marginal win, left off by default).

    common = dict(gamma=float(gamma), alpha=float(alpha), scale=float(loss_weight),
                  approx=bool(approx_reciprocal), num_rows=N, num_cols=C,
                  tile_n=tile_n, tile_c=tile_c, chunk=chunk,
                  mask_rows=mask_rows, mask_cols=mask_cols, multi_c=grid_c > 1)

    if reduction == "none":
        kernel = functools.partial(_focal_none_kernel, **common)
        # Exact (N, C) output; loss_weight folded in-kernel -> no slice/scale epilogue.
        return pl.pallas_call(
            kernel,
            out_shape=jax.ShapeDtypeStruct((N, C), pred.dtype),
            grid=(grid_n, grid_c),
            in_specs=in_specs,
            out_specs=pl.BlockSpec((tile_n, tile_c), lambda i, j: (i, j)),
            compiler_params=cparams,
        )(pred, tgt2, w2)

    # 'sum' / 'mean': emit (8, tile_c) partial sums per grid step, reduce in JAX.
    kernel = functools.partial(_focal_sum_kernel, **common)
    partial_sums = pl.pallas_call(
        kernel,
        out_shape=jax.ShapeDtypeStruct((grid_n * 8, grid_c * tile_c), jnp.float32),
        grid=(grid_n, grid_c),
        in_specs=in_specs,
        out_specs=pl.BlockSpec((8, tile_c), lambda i, j: (i, j)),
        compiler_params=cparams,
    )(pred, tgt2, w2)

    s = jnp.sum(partial_sums)
    if reduction == "sum":
        return s
    denom = (N * C) if avg_factor is None else avg_factor
    return s / denom


# --- pure-JAX reference for validation --------------------------------------
def _reference_elementwise(pred, target, weight, gamma, alpha):
    N, C = pred.shape
    t = jax.nn.one_hot(target, C, dtype=pred.dtype)
    p = jax.nn.sigmoid(pred)
    pt = (1 - p) * t + p * (1 - t)
    fw = (alpha * t + (1 - alpha) * (1 - t)) * pt ** gamma
    bce = jnp.maximum(pred, 0) - pred * t + jnp.log1p(jnp.exp(-jnp.abs(pred)))
    return bce * fw * weight.reshape(-1, 1)


if __name__ == "__main__":
    # FocalLoss(use_sigmoid=True, gamma=2.0, alpha=0.25, reduction='mean',
    #           loss_weight=1.0) has no learned parameters.
    key = jax.random.PRNGKey(0)
    k1, k2, k3, k4, k5, k6 = jax.random.split(key, 6)

    # -- case 1: small aligned shapes (N=64, C=16), exact reciprocal, tight check
    N, C = 64, 16
    pred = jax.random.normal(k1, (N, C), dtype=jnp.float32)
    target = jax.random.randint(k2, (N,), 0, C, dtype=jnp.int32)
    weight = jax.random.uniform(k3, (N,), dtype=jnp.float32)
    ref_elem = _reference_elementwise(pred, target, weight, 2.0, 0.25)

    out_mean = sigmoid_focal_loss_pallas(pred, target, weight, reduction="mean",
                                         approx_reciprocal=False)
    out_sum = sigmoid_focal_loss_pallas(pred, target, weight, reduction="sum",
                                        approx_reciprocal=False)
    out_none = sigmoid_focal_loss_pallas(pred, target, weight, reduction="none",
                                         approx_reciprocal=False)
    jax.block_until_ready((out_mean, out_sum, out_none))
    assert jnp.allclose(out_mean, jnp.mean(ref_elem), rtol=1e-4, atol=1e-6)
    assert jnp.allclose(out_sum, jnp.sum(ref_elem), rtol=1e-4, atol=1e-5)
    assert jnp.allclose(out_none, ref_elem, rtol=1e-4, atol=1e-6)

    # fast path (EUP approx reciprocal, default) -> looser tolerance
    fast_mean = sigmoid_focal_loss_pallas(pred, target, weight, reduction="mean")
    fast_none = sigmoid_focal_loss_pallas(pred, target, weight, reduction="none")
    jax.block_until_ready((fast_mean, fast_none))
    assert jnp.allclose(fast_mean, jnp.mean(ref_elem), rtol=2e-2, atol=1e-4)
    assert jnp.allclose(fast_none, ref_elem, rtol=2e-2, atol=1e-3)

    # no-weight + loss_weight folding
    out_lw = sigmoid_focal_loss_pallas(pred, target, None, reduction="mean",
                                       loss_weight=0.5, approx_reciprocal=False)
    ref_lw = 0.5 * jnp.mean(_reference_elementwise(pred, target, jnp.ones((N,)), 2.0, 0.25))
    jax.block_until_ready(out_lw)
    assert jnp.allclose(out_lw, ref_lw, rtol=1e-4, atol=1e-6)

    # mmdet background convention (target == num_classes -> all-zero one-hot row)
    target_bg = target.at[0].set(C)
    out_bg = sigmoid_focal_loss_pallas(pred, target_bg, weight, reduction="none",
                                       approx_reciprocal=False)
    ref_bg = _reference_elementwise(pred, target_bg, weight, 2.0, 0.25)
    jax.block_until_ready(out_bg)
    assert jnp.allclose(out_bg, ref_bg, rtol=1e-4, atol=1e-6)

    # -- case 2: odd shapes (N=37, C=10) -> exercises in-kernel edge-row masking
    N2, C2 = 37, 10
    pred2 = jax.random.normal(k4, (N2, C2), dtype=jnp.float32)
    target2 = jax.random.randint(k5, (N2,), 0, C2, dtype=jnp.int32)
    ref2 = _reference_elementwise(pred2, target2, jnp.ones((N2,)), 2.0, 0.25)
    o2_mean = sigmoid_focal_loss_pallas(pred2, target2, None, reduction="mean",
                                        approx_reciprocal=False)
    o2_none = sigmoid_focal_loss_pallas(pred2, target2, None, reduction="none",
                                        approx_reciprocal=False)
    jax.block_until_ready((o2_mean, o2_none))
    assert jnp.allclose(o2_mean, jnp.mean(ref2), rtol=1e-4, atol=1e-6)
    assert jnp.allclose(o2_none, ref2, rtol=1e-4, atol=1e-6)

    # -- case 3: larger N -> exercises the inner pl.loop chunking + avg_factor
    N3, C3 = 1500, 40
    pred3 = jax.random.normal(k6, (N3, C3), dtype=jnp.float32)
    target3 = jax.random.randint(k2, (N3,), 0, C3, dtype=jnp.int32)
    ref3 = _reference_elementwise(pred3, target3, jnp.ones((N3,)), 2.0, 0.25)
    o3_mean = sigmoid_focal_loss_pallas(pred3, target3, None, reduction="mean",
                                        avg_factor=123.0, approx_reciprocal=False)
    o3_none = sigmoid_focal_loss_pallas(pred3, target3, None, reduction="none",
                                        approx_reciprocal=False)
    jax.block_until_ready((o3_mean, o3_none))
    assert jnp.allclose(o3_mean, jnp.sum(ref3) / 123.0, rtol=1e-4, atol=1e-5)
    assert jnp.allclose(o3_none, ref3, rtol=1e-4, atol=1e-6)

    print("KERNEL_OK")
</pallas_src>

<mosaic_0001>
module attributes {stable_mosaic.version = 11 : i64} {
  func.func @_focal_sum_kernel(%arg0: i32, %arg1: i32, %arg2: memref<32x16xf32, #tpu.memory_space<vmem>>, %arg3: memref<32x1xi32, #tpu.memory_space<vmem>>, %arg4: memref<32x1xf32, #tpu.memory_space<vmem>>, %arg5: memref<8x16xf32, #tpu.memory_space<vmem>>) attributes {dimension_semantics = [#tpu.dimension_semantics<parallel>, #tpu.dimension_semantics<parallel>], iteration_bounds = array<i64: 2, 1>, scalar_prefetch = 0 : i64, scratch_operands = 0 : i64, tpu.core_type = #tpu.core_type<tc>, window_params = [{transform_indices = @transform_0, window_bounds = array<i64: 32, 16>}, {transform_indices = @transform_1, window_bounds = array<i64: 32, 1>}, {transform_indices = @transform_2, window_bounds = array<i64: 32, 1>}, {transform_indices = @transform_3, window_bounds = array<i64: 8, 16>}]} {
    %c0 = arith.constant 0 : index
    %c0_0 = arith.constant 0 : index
    %0 = vector.load %arg2[%c0, %c0_0] : memref<32x16xf32, #tpu.memory_space<vmem>>, vector<32x16xf32>
    %c0_1 = arith.constant 0 : index
    %c0_2 = arith.constant 0 : index
    %1 = vector.load %arg3[%c0_1, %c0_2] : memref<32x1xi32, #tpu.memory_space<vmem>>, vector<32x1xi32>
    %c0_3 = arith.constant 0 : index
    %c0_4 = arith.constant 0 : index
    %2 = vector.load %arg4[%c0_3, %c0_4] : memref<32x1xf32, #tpu.memory_space<vmem>>, vector<32x1xf32>
    %3 = tpu.iota {dimensions = array<i32: 1>} : vector<32x16xi32>
    %4 = vector.broadcast %1 : vector<32x1xi32> to vector<32x16xi32>
    %5 = arith.cmpi eq, %3, %4 : vector<32x16xi32>
    %6 = math.absf %0 : vector<32x16xf32>
    %cst = arith.constant 0.000000e+00 : f32
    %7 = vector.broadcast %cst : f32 to vector<32x16xf32>
    %8 = arith.subf %7, %6 : vector<32x16xf32>
    %9 = math.exp %8 : vector<32x16xf32>
    %cst_5 = arith.constant 1.000000e+00 : f32
    %10 = vector.broadcast %cst_5 : f32 to vector<32x16xf32>
    %11 = arith.addf %10, %9 : vector<32x16xf32>
    %12 = tpu.reciprocal %11 : vector<32x16xf32> -> vector<32x16xf32>
    %cst_6 = arith.constant 0.000000e+00 : f32
    %13 = vector.broadcast %cst_6 : f32 to vector<32x16xf32>
    %14 = arith.cmpf oge, %0, %13 : vector<32x16xf32>
    %cst_7 = arith.constant 1.000000e+00 : f32
    %15 = vector.broadcast %cst_7 : f32 to vector<32x16xf32>
    %16 = arith.subf %15, %12 : vector<32x16xf32>
    %17 = arith.select %14, %12, %16 : vector<32x16xi1>, vector<32x16xf32>
    %cst_8 = arith.constant 1.000000e+00 : f32
    %18 = vector.broadcast %cst_8 : f32 to vector<32x16xf32>
    %19 = arith.subf %18, %17 : vector<32x16xf32>
    %20 = arith.select %5, %19, %17 : vector<32x16xi1>, vector<32x16xf32>
    %21 = arith.mulf %20, %20 : vector<32x16xf32>
    %cst_9 = arith.constant 2.500000e-01 : f32
    %cst_10 = arith.constant 7.500000e-01 : f32
    %22 = vector.broadcast %cst_9 : f32 to vector<32x16xf32>
    %23 = vector.broadcast %cst_10 : f32 to vector<32x16xf32>
    %24 = arith.select %5, %22, %23 : vector<32x16xi1>, vector<32x16xf32>
    %25 = arith.mulf %24, %21 : vector<32x16xf32>
    %cst_11 = arith.constant 0.000000e+00 : f32
    %26 = vector.broadcast %cst_11 : f32 to vector<32x16xf32>
    %27 = arith.maximumf %0, %26 : vector<32x16xf32>
    %cst_12 = arith.constant 0.000000e+00 : f32
    %28 = vector.broadcast %cst_12 : f32 to vector<32x16xf32>
    %29 = arith.select %5, %0, %28 : vector<32x16xi1>, vector<32x16xf32>
    %30 = arith.subf %27, %29 : vector<32x16xf32>
    %31 = math.log1p %9 : vector<32x16xf32>
    %32 = arith.addf %30, %31 : vector<32x16xf32>
    %33 = arith.mulf %32, %25 : vector<32x16xf32>
    %34 = vector.broadcast %2 : vector<32x1xf32> to vector<32x16xf32>
    %35 = arith.mulf %33, %34 : vector<32x16xf32>
    %36 = vector.shape_cast %35 : vector<32x16xf32> to vector<4x8x16xf32>
    %cst_13 = arith.constant dense<0.000000e+00> : vector<8x16xf32>
    %37 = vector.multi_reduction <add>, %36, %cst_13 [0] : vector<4x8x16xf32> to vector<8x16xf32>
    %c0_14 = arith.constant 0 : index
    %c0_15 = arith.constant 0 : index
    %38 = vector.load %arg5[%c0_14, %c0_15] : memref<8x16xf32, #tpu.memory_space<vmem>>, vector<8x16xf32>
    tpu.vector_store %arg5[%c0_14, %c0_15], %37 {strides = array<i32>} : memref<8x16xf32, #tpu.memory_space<vmem>>, vector<8x16xf32>,
    return
  }
  func.func @transform_0(%arg0: i32, %arg1: i32) -> (i32, i32) {
    %c0_i32 = arith.constant 0 : i32
    return %arg0, %arg1 : i32, i32
  }
  func.func @transform_1(%arg0: i32, %arg1: i32) -> (i32, i32) {
    %c0_i32 = arith.constant 0 : i32
    %c0_i32_0 = arith.constant 0 : i32
    return %arg0, %c0_i32 : i32, i32
  }
  func.func @transform_2(%arg0: i32, %arg1: i32) -> (i32, i32) {
    %c0_i32 = arith.constant 0 : i32
    %c0_i32_0 = arith.constant 0 : i32
    return %arg0, %c0_i32 : i32, i32
  }
  func.func @transform_3(%arg0: i32, %arg1: i32) -> (i32, i32) {
    %c0_i32 = arith.constant 0 : i32
    return %arg0, %arg1 : i32, i32
  }
}

</mosaic_0001>

<llo_original>
// kernel: tpu_custom_call.1
$region0: #{tpu_custom_call.1}
  #allocation0 [shape = 'u32[]', space=smem, size = 0x4, offset = 0x4, fixed_abs, tag = 'smem constant byte address 0x4 - core index']
  #allocation1 [shape = 'u32[72,128]{1,0:T(1,128)}', space=vmem, size = 0x9000, scoped, tag = 'internal scratch']
  %s0 = inlined_call_operand.vmem [shape: f32[64,16], index: 0, kind: input, shape index: {}]
  %s1 = inlined_call_operand.vmem [shape: s32[64,1], index: 1, kind: input, shape index: {}]
  %s2 = inlined_call_operand.vmem [shape: f32[64,1], index: 2, kind: input, shape index: {}]
  %s3 = inlined_call_operand.hbm [shape: f32[16,16], index: 3, kind: output, shape index: {}]
  %s4 = sld [smem:[#allocation0]]
  $region45: #{tpu_custom_call.1} parent=0
    _
  %s6 = ssub.s32 1, %s4
  %s7 = scalar_select 0, %s6, %s4
  $region1: #{tpu_custom_call.1} parent=0
    #allocation2 [shape = 'u8[8192]{0}', space=vmem, size = 0x2000, scoped, tag = 'output window, operand 0']
    #allocation3 [shape = 's32[2]{0}', space=sflag, size = 0x8, scoped, tag = 'scoped memory for tpu_custom_call.1']
    %8 = vsyncpa [#allocation3], 0
    %s9 = scalar_lea.sflag [#allocation3], 1
    %10 = vsyncpa %s9, 0
    loop: start=0, step=1, limit=4
    $region2: #{tpu_custom_call.1} parent=1 // loop_pre_header
      _
    $region3: #{tpu_custom_call.1} parent=1 // loop_header
      %s12 = sphi 0, %s16
      %p13 = scmp.ge.s32.totalorder %s12, 4
      %s19 = sphi 0, %s31
      %s20 = sphi 0, %s27
      %s21 = sphi 0, %s19
      %s22 = sphi 0, %s20
      %s23 = sphi 0, %s21
      %s24 = sphi 0, %s22
      %s36 = sphi 0, %s38
      %s39 = sphi 0, %s36
      %s40 = sphi 0, %s39
      %s56 = sphi 0, %s40
      %s62 = sphi 0, %s64
      %s65 = sphi 0, %s62
      %s66 = sphi 0, %s65
      %s82 = sphi 0, %s66
      %s88 = sphi 0, %s90
      %s91 = sphi 0, %s88
      %s92 = sphi 0, %s91
      %s108 = sphi 0, %s92
      %s116 = sphi 0, %s118
      %s119 = sphi 0, %s116
      %s120 = sphi 0, %s119
      %s136 = sphi 0, %s120
    $region4: #{tpu_custom_call.1} parent=1 // loop_header_branch
      %15 = sbr.rel (%p13) target = $region8
    $region5: #{tpu_custom_call.1} parent=1 // loop_body
      %s17 = ssub.s32 %s12, 1
      %s18 = ssub.s32 %s12, 2
      %s25 = sadd.s32 1, %s20
      %p26 = scmp.ge.s32.totalorder %s25, 1
      %s27 = scalar_select %p26, 0, %s25
      %s28 = sadd.s32 1, %s19
      %s29 = scalar_select %p26, %s28, %s19
      %p30 = scmp.ge.s32.totalorder %s29, 2
      %s31 = scalar_select %p30, 0, %s29
      %s32 = ssub.s32 %s19, %s31
      %s33 = ssub.s32 %s20, %s27
      %s34 = sor.u32 %s32, %s33
      %p35 = scmp.eq.s32.totalorder %s34, 0
      %s37 = sadd.s32 %s36, 1
      %s38 = scalar_select %p35, %s36, %s37
      %p41 = pneg %p35
      %p42 = scmp.eq.s32.totalorder %s12, 1
      %p43 = por %p41, %p42
      %p44 = scmp.ne.s32.totalorder %s36, %s39
      %p45 = scmp.eq.s32.totalorder %s12, 0
      %p46 = por %p44, %p45
      %p47 = scmp.ne.s32.totalorder %s36, %s39
      %p48 = scmp.eq.s32.totalorder %s17, 1
      %p49 = por %p47, %p48
      %p50 = scmp.ne.s32.totalorder %s39, %s40
      %p51 = scmp.eq.s32.totalorder %s17, 0
      %p52 = por %p50, %p51
      %p53 = scmp.ne.s32.totalorder %s39, %s40
      %p54 = scmp.eq.s32.totalorder %s18, 1
      %p55 = por %p53, %p54
      %p57 = scmp.ne.s32.totalorder %s40, %s56
      %p58 = scmp.eq.s32.totalorder %s18, 0
      %p59 = por %p57, %p58
      %s60 = ssub.s32 %s19, %s31
      %p61 = scmp.eq.s32.totalorder %s60, 0
      %s63 = sadd.s32 %s62, 1
      %s64 = scalar_select %p61, %s62, %s63
      %p67 = pneg %p61
      %p68 = scmp.eq.s32.totalorder %s12, 1
      %p69 = por %p67, %p68
      %p70 = scmp.ne.s32.totalorder %s62, %s65
      %p71 = scmp.eq.s32.totalorder %s12, 0
      %p72 = por %p70, %p71
      %p73 = scmp.ne.s32.totalorder %s62, %s65
      %p74 = scmp.eq.s32.totalorder %s17, 1
      %p75 = por %p73, %p74
      %p76 = scmp.ne.s32.totalorder %s65, %s66
      %p77 = scmp.eq.s32.totalorder %s17, 0
      %p78 = por %p76, %p77
      %p79 = scmp.ne.s32.totalorder %s65, %s66
      %p80 = scmp.eq.s32.totalorder %s18, 1
      %p81 = por %p79, %p80
      %p83 = scmp.ne.s32.totalorder %s66, %s82
      %p84 = scmp.eq.s32.totalorder %s18, 0
      %p85 = por %p83, %p84
      %s86 = ssub.s32 %s19, %s31
      %p87 = scmp.eq.s32.totalorder %s86, 0
      %s89 = sadd.s32 %s88, 1
      %s90 = scalar_select %p87, %s88, %s89
      %p93 = pneg %p87
      %p94 = scmp.eq.s32.totalorder %s12, 1
      %p95 = por %p93, %p94
      %p96 = scmp.ne.s32.totalorder %s88, %s91
      %p97 = scmp.eq.s32.totalorder %s12, 0
      %p98 = por %p96, %p97
      %p99 = scmp.ne.s32.totalorder %s88, %s91
      %p100 = scmp.eq.s32.totalorder %s17, 1
      %p101 = por %p99, %p100
      %p102 = scmp.ne.s32.totalorder %s91, %s92
      %p103 = scmp.eq.s32.totalorder %s17, 0
      %p104 = por %p102, %p103
      %p105 = scmp.ne.s32.totalorder %s91, %s92
      %p106 = scmp.eq.s32.totalorder %s18, 1
      %p107 = por %p105, %p106
      %p109 = scmp.ne.s32.totalorder %s92, %s108
      %p110 = scmp.eq.s32.totalorder %s18, 0
      %p111 = por %p109, %p110
      %s112 = ssub.s32 %s19, %s31
      %s113 = ssub.s32 %s20, %s27
      %s114 = sor.u32 %s112, %s113
      %p115 = scmp.eq.s32.totalorder %s114, 0
      %s117 = sadd.s32 %s116, 1
      %s118 = scalar_select %p115, %s116, %s117
      %p121 = pneg %p115
      %p122 = scmp.eq.s32.totalorder %s12, 1
      %p123 = por %p121, %p122
      %p124 = scmp.ne.s32.totalorder %s116, %s119
      %p125 = scmp.eq.s32.totalorder %s12, 0
      %p126 = por %p124, %p125
      %p127 = scmp.ne.s32.totalorder %s116, %s119
      %p128 = scmp.eq.s32.totalorder %s17, 1
      %p129 = por %p127, %p128
      %p130 = scmp.ne.s32.totalorder %s119, %s120
      %p131 = scmp.eq.s32.totalorder %s17, 0
      %p132 = por %p130, %p131
      %p133 = scmp.ne.s32.totalorder %s119, %s120
      %p134 = scmp.eq.s32.totalorder %s18, 1
      %p135 = por %p133, %p134
      %p137 = scmp.ne.s32.totalorder %s120, %s136
      %p138 = scmp.eq.s32.totalorder %s18, 0
      %p139 = por %p137, %p138
      %p140 = scmp.le.s32.totalorder 1, %s12
      %p141 = scmp.lt.s32.totalorder %s12, 3
      %p142 = pnand %p140, %p141
      %p143 = pneg %p142
      // Predicated region
      $region9: #{tpu_custom_call.1} parent=5 // pred_check
        _
      $region10: #{tpu_custom_call.1} parent=5 // pred_check_branch
        %145 = sbr.rel (%p142) target = $region12
      $region11: #{tpu_custom_call.1} parent=5 // pred_region
        %s146 = ssub.s32 %s12, 1
      $region12: #{tpu_custom_call.1} parent=5 // pred_fallthru
        _
      %p147 = scmp.lt.s32.totalorder %s12, 2
      // Predicated region
      $region13: #{tpu_custom_call.1} parent=5 // pred_check
        %p148 = pneg %p147
      $region14: #{tpu_custom_call.1} parent=5 // pred_check_branch
        %150 = sbr.rel (%p148) target = $region16
      $region15: #{tpu_custom_call.1} parent=5 // pred_region
        // Predicated region
        $region17: #{tpu_custom_call.1} parent=15 // pred_check
          %p151 = pneg %p46
        $region18: #{tpu_custom_call.1} parent=15 // pred_check_branch
          %153 = sbr.rel (%p151) target = $region20
        $region19: #{tpu_custom_call.1} parent=15 // pred_region
          %s154 = smul.u32 4, %s19
          %p155 = scmp.lt.s32.totalorder %s154, 7
          %s156 = scalar_select %p155, %s154, 7
          %p157 = scmp.lt.s32.totalorder %s20, 0
          %s158 = scalar_select %p157, %s20, 0
          %s159 = sadd.s32 %s158, %s156
          %s160 = smul.addr %s159, 8
          %s161 = scalar_lea.vmem %s0, %s160
          %s162 = smul.u32 4, %s19
        $region20: #{tpu_custom_call.1} parent=15 // pred_fallthru
          _
        // Predicated region
        $region21: #{tpu_custom_call.1} parent=15 // pred_check
          %p163 = pneg %p72
        $region22: #{tpu_custom_call.1} parent=15 // pred_check_branch
          %165 = sbr.rel (%p163) target = $region24
        $region23: #{tpu_custom_call.1} parent=15 // pred_region
          %s166 = smul.u32 4, %s19
          %p167 = scmp.lt.s32.totalorder %s166, 7
          %s168 = scalar_select %p167, %s166, 7
          %s169 = smul.addr %s168, 8
          %s170 = scalar_lea.vmem %s1, %s169
          %s171 = smul.u32 4, %s19
        $region24: #{tpu_custom_call.1} parent=15 // pred_fallthru
          _
        // Predicated region
        $region25: #{tpu_custom_call.1} parent=15 // pred_check
          %p172 = pneg %p98
        $region26: #{tpu_custom_call.1} parent=15 // pred_check_branch
          %174 = sbr.rel (%p172) target = $region28
        $region27: #{tpu_custom_call.1} parent=15 // pred_region
          %s175 = smul.u32 4, %s19
          %p176 = scmp.lt.s32.totalorder %s175, 7
          %s177 = scalar_select %p176, %s175, 7
          %s178 = smul.addr %s177, 8
          %s179 = scalar_lea.vmem %s2, %s178
          %s180 = smul.u32 4, %s19
        $region28: #{tpu_custom_call.1} parent=15 // pred_fallthru
          _
      $region16: #{tpu_custom_call.1} parent=5 // pred_fallthru
        _
      %p181 = scmp.le.s32.totalorder 1, %s12
      %p182 = scmp.lt.s32.totalorder %s12, 3
      %p183 = pnand %p181, %p182
      %p184 = pneg %p183
      // Predicated region
      $region29: #{tpu_custom_call.1} parent=5 // pred_check
        _
      $region30: #{tpu_custom_call.1} parent=5 // pred_check_branch
        %186 = sbr.rel (%p183) target = $region32
      $region31: #{tpu_custom_call.1} parent=5 // pred_region
        %s187 = ssub.s32 %s12, 1
        %s188 = smul.u32 4, %s21
        %p189 = scmp.lt.s32.totalorder %s188, 7
        %s190 = scalar_select %p189, %s188, 7
        %p191 = scmp.lt.s32.totalorder %s22, 0
        %s192 = scalar_select %p191, %s22, 0
        %s193 = sadd.s32 %s192, %s190
        %s194 = smul.addr %s193, 8
        %s195 = scalar_lea.vmem %s0, %s194
        %p196 = pneg %p52
        %p197 = pneg %p49
        %s198 = smul.u32 4, %s21
        %p199 = scmp.lt.s32.totalorder %s198, 7
        %s200 = scalar_select %p199, %s198, 7
        %s201 = smul.addr %s200, 8
        %s202 = scalar_lea.vmem %s1, %s201
        %p203 = pneg %p78
        %p204 = pneg %p75
        %s205 = smul.u32 4, %s21
        %p206 = scmp.lt.s32.totalorder %s205, 7
        %s207 = scalar_select %p206, %s205, 7
        %s208 = smul.addr %s207, 8
        %s209 = scalar_lea.vmem %s2, %s208
        %p210 = pneg %p104
        %p211 = pneg %p101
        %p212 = pneg %p132
        %p213 = pneg %p129
        %s214 = sand.u32 %s119, 1
        %s215 = scalar_lea.sflag [#allocation3], %s214
        %s216 = sand.u32 %s119, 1
        %s217 = smul.addr %s216, 8
        %s218 = scalar_lea.vmem [#allocation2], %s217
        %s219 = smul.u32 4, %s21
        %p220 = scmp.lt.s32.totalorder %s219, 7
        %s221 = scalar_select %p220, %s219, 7
        %p222 = scmp.lt.s32.totalorder %s22, 0
        %s223 = scalar_select %p222, %s22, 0
        %s224 = sadd.s32 %s223, %s221
        %s225 = smul.addr %s224, 8
        %s226 = scalar_lea.vmem %s0, %s225
        %s227 = smul.u32 4, %s21
        %s228 = smul.u32 4, %s21
        %p229 = scmp.lt.s32.totalorder %s228, 7
        %s230 = scalar_select %p229, %s228, 7
        %s231 = smul.addr %s230, 8
        %s232 = scalar_lea.vmem %s1, %s231
        %s233 = smul.u32 4, %s21
        %s234 = smul.u32 4, %s21
        %p235 = scmp.lt.s32.totalorder %s234, 7
        %s236 = scalar_select %p235, %s234, 7
        %s237 = smul.addr %s236, 8
        %s238 = scalar_lea.vmem %s2, %s237
        %s239 = smul.u32 4, %s21
        %v240 = vld [vmem:[%s226] sm:$0xff]
        %v241 = vld [vmem:[%s226 + $0x8] sm:$0xff]
        %v242 = vld [vmem:[%s226 + $0x10] sm:$0xff]
        %v243 = vld [vmem:[%s226 + $0x18] sm:$0xff]
        %v244 = vld [vmem:[%s232] sm:$0xff]
        %v245 = vld [vmem:[%s232 + $0x8] sm:$0xff]
        %v246 = vld [vmem:[%s232 + $0x10] sm:$0xff]
        %v247 = vld [vmem:[%s232 + $0x18] sm:$0xff]
        %v248 = vld [vmem:[%s238] sm:$0xff]
        %v249 = vld [vmem:[%s238 + $0x8] sm:$0xff]
        %v250 = vld [vmem:[%s238 + $0x10] sm:$0xff]
        %v251 = vld [vmem:[%s238 + $0x18] sm:$0xff]
        %v252 = vlaneseq
        %v253 = vand.u32 %v252, 127
        %254 = vset.pattern.permute.xlu0 0
        %255 = vperm.xlu0 %254, %v244
        %v256 = vpop.permute.xlu0 %255
        %257 = vset.pattern.permute.xlu0 0
        %258 = vperm.xlu0 %257, %v245
        %v259 = vpop.permute.xlu0 %258
        %260 = vset.pattern.permute.xlu0 0
        %261 = vperm.xlu0 %260, %v246
        %v262 = vpop.permute.xlu0 %261
        %263 = vset.pattern.permute.xlu0 0
        %264 = vperm.xlu0 %263, %v247
        %v265 = vpop.permute.xlu0 %264
        %vm266 = vcmp.eq.s32.totalorder %v253, %v256
        %vm267 = vcmp.eq.s32.totalorder %v253, %v259
        %vm268 = vcmp.eq.s32.totalorder %v253, %v262
        %vm269 = vcmp.eq.s32.totalorder %v253, %v265
        %v270 = vand.u32 2147483647, %v240
        %v271 = vand.u32 2147483647, %v241
        %v272 = vand.u32 2147483647, %v242
        %v273 = vand.u32 2147483647, %v243
        %v274 = vsub.f32 0.0, %v270
        %v275 = vsub.f32 0.0, %v271
        %v276 = vsub.f32 0.0, %v272
        %v277 = vsub.f32 0.0, %v273
        %v278 = vmul.f32 %v274, 1.442695
        %v279 = vpow.pop %v278
        %v280 = vmul.f32 %v275, 1.442695
        %v281 = vpow.pop %v280
        %v282 = vmul.f32 %v276, 1.442695
        %v283 = vpow.pop %v282
        %v284 = vmul.f32 %v277, 1.442695
        %v285 = vpow.pop %v284
        %v286 = vadd.f32 %v279, 1.0
        %v287 = vadd.f32 %v281, 1.0
        %v288 = vadd.f32 %v283, 1.0
        %v289 = vadd.f32 %v285, 1.0
        %v290 = vrcp.pop %v286
        %v291 = vmul.f32 %v286, %v290
        %v292 = vsub.f32 1.0, %v291
        %v293 = vmul.f32 %v290, %v292
        %v294 = vadd.f32 %v290, %v293
        %vm295 = vweird.f32 %v286
        %vm296 = vweird.f32 %v290
        %vm297 = vmor %vm295, %vm296
        %v298 = vsel %vm297, %v290, %v294
        %v299 = vand.u32 2147483647, %v286
        %vm300 = vcmp.eq.f32.partialorder %v299, 8.507059e+37
        %v301 = vand.u32 %v286, 2147483648
        %v302 = vor.u32 1.1754944e-38, %v301
        %v303 = vsel %vm300, %v302, %v298
        %v304 = vrcp.pop %v287
        %v305 = vmul.f32 %v287, %v304
        %v306 = vsub.f32 1.0, %v305
        %v307 = vmul.f32 %v304, %v306
        %v308 = vadd.f32 %v304, %v307
        %vm309 = vweird.f32 %v287
        %vm310 = vweird.f32 %v304
        %vm311 = vmor %vm309, %vm310
        %v312 = vsel %vm311, %v304, %v308
        %v313 = vand.u32 2147483647, %v287
        %vm314 = vcmp.eq.f32.partialorder %v313, 8.507059e+37
        %v315 = vand.u32 %v287, 2147483648
        %v316 = vor.u32 1.1754944e-38, %v315
        %v317 = vsel %vm314, %v316, %v312
        %v318 = vrcp.pop %v288
        %v319 = vmul.f32 %v288, %v318
        %v320 = vsub.f32 1.0, %v319
        %v321 = vmul.f32 %v318, %v320
        %v322 = vadd.f32 %v318, %v321
        %vm323 = vweird.f32 %v288
        %vm324 = vweird.f32 %v318
        %vm325 = vmor %vm323, %vm324
        %v326 = vsel %vm325, %v318, %v322
        %v327 = vand.u32 2147483647, %v288
        %vm328 = vcmp.eq.f32.partialorder %v327, 8.507059e+37
        %v329 = vand.u32 %v288, 2147483648
        %v330 = vor.u32 1.1754944e-38, %v329
        %v331 = vsel %vm328, %v330, %v326
        %v332 = vrcp.pop %v289
        %v333 = vmul.f32 %v289, %v332
        %v334 = vsub.f32 1.0, %v333
        %v335 = vmul.f32 %v332, %v334
        %v336 = vadd.f32 %v332, %v335
        %vm337 = vweird.f32 %v289
        %vm338 = vweird.f32 %v332
        %vm339 = vmor %vm337, %vm338
        %v340 = vsel %vm339, %v332, %v336
        %v341 = vand.u32 2147483647, %v289
        %vm342 = vcmp.eq.f32.partialorder %v341, 8.507059e+37
        %v343 = vand.u32 %v289, 2147483648
        %v344 = vor.u32 1.1754944e-38, %v343
        %v345 = vsel %vm342, %v344, %v340
        %vm346 = vcmp.ge.f32.partialorder %v240, 0.0
        %vm347 = vcmp.ge.f32.partialorder %v241, 0.0
        %vm348 = vcmp.ge.f32.partialorder %v242, 0.0
        %vm349 = vcmp.ge.f32.partialorder %v243, 0.0
        %v350 = vsub.f32 1.0, %v303
        %v351 = vsub.f32 1.0, %v317
        %v352 = vsub.f32 1.0, %v331
        %v353 = vsub.f32 1.0, %v345
        %v354 = vsel %vm346, %v303, %v350
        %v355 = vsel %vm347, %v317, %v351
        %v356 = vsel %vm348, %v331, %v352
        %v357 = vsel %vm349, %v345, %v353
        %v358 = vsub.f32 1.0, %v354
        %v359 = vsub.f32 1.0, %v355
        %v360 = vsub.f32 1.0, %v356
        %v361 = vsub.f32 1.0, %v357
        %v362 = vsel %vm266, %v358, %v354
        %v363 = vsel %vm267, %v359, %v355
        %v364 = vsel %vm268, %v360, %v356
        %v365 = vsel %vm269, %v361, %v357
        %v366 = vmul.f32 %v362, %v362
        %v367 = vmul.f32 %v363, %v363
        %v368 = vmul.f32 %v364, %v364
        %v369 = vmul.f32 %v365, %v365
        %v370 = vsel %vm266, 0.25, 0.75
        %v371 = vsel %vm267, 0.25, 0.75
        %v372 = vsel %vm268, 0.25, 0.75
        %v373 = vsel %vm269, 0.25, 0.75
        %v374 = vmul.f32 %v370, %v366
        %v375 = vmul.f32 %v371, %v367
        %v376 = vmul.f32 %v372, %v368
        %v377 = vmul.f32 %v373, %v369
        %v378 = vmax.f32 %v240, 0.0
        %v379 = vmax.f32 %v241, 0.0
        %v380 = vmax.f32 %v242, 0.0
        %v381 = vmax.f32 %v243, 0.0
        %v382 = vsel %vm266, %v240, 0.0
        %v383 = vsel %vm267, %v241, 0.0
        %v384 = vsel %vm268, %v242, 0.0
        %v385 = vsel %vm269, %v243, 0.0
        %v386 = vsub.f32 %v378, %v382
        %v387 = vsub.f32 %v379, %v383
        %v388 = vsub.f32 %v380, %v384
        %v389 = vsub.f32 %v381, %v385
        %v390 = vadd.f32 %v279, 1.0
        %v391 = vlog2.pop %v390
        %v392 = vmul.f32 %v391, 0.6931472
        %v393 = vmul.f32 -0.5, %v279
        %v394 = vadd.f32 %v393, 1.0
        %v395 = vmul.f32 %v394, %v279
        %v396 = vand.u32 2147483647, %v279
        %vm397 = vcmp.lt.f32.partialorder %v396, 0.0004427343
        %v398 = vsel %vm397, %v395, %v392
        %v399 = vadd.f32 %v281, 1.0
        %v400 = vlog2.pop %v399
        %v401 = vmul.f32 %v400, 0.6931472
        %v402 = vmul.f32 -0.5, %v281
        %v403 = vadd.f32 %v402, 1.0
        %v404 = vmul.f32 %v403, %v281
        %v405 = vand.u32 2147483647, %v281
        %vm406 = vcmp.lt.f32.partialorder %v405, 0.0004427343
        %v407 = vsel %vm406, %v404, %v401
        %v408 = vadd.f32 %v283, 1.0
        %v409 = vlog2.pop %v408
        %v410 = vmul.f32 %v409, 0.6931472
        %v411 = vmul.f32 -0.5, %v283
        %v412 = vadd.f32 %v411, 1.0
        %v413 = vmul.f32 %v412, %v283
        %v414 = vand.u32 2147483647, %v283
        %vm415 = vcmp.lt.f32.partialorder %v414, 0.0004427343
        %v416 = vsel %vm415, %v413, %v410
        %v417 = vadd.f32 %v285, 1.0
        %v418 = vlog2.pop %v417
        %v419 = vmul.f32 %v418, 0.6931472
        %v420 = vmul.f32 -0.5, %v285
        %v421 = vadd.f32 %v420, 1.0
        %v422 = vmul.f32 %v421, %v285
        %v423 = vand.u32 2147483647, %v285
        %vm424 = vcmp.lt.f32.partialorder %v423, 0.0004427343
        %v425 = vsel %vm424, %v422, %v419
        %v426 = vadd.f32 %v386, %v398
        %v427 = vadd.f32 %v387, %v407
        %v428 = vadd.f32 %v388, %v416
        %v429 = vadd.f32 %v389, %v425
        %v430 = vmul.f32 %v426, %v374
        %v431 = vmul.f32 %v427, %v375
        %v432 = vmul.f32 %v428, %v376
        %v433 = vmul.f32 %v429, %v377
        %435 = vset.pattern.permute.xlu0 0
        %436 = vperm.xlu0 %435, %v248
        %v437 = vpop.permute.xlu0 %436
        %440 = vset.pattern.permute.xlu0 0
        %441 = vperm.xlu0 %440, %v249
        %v442 = vpop.permute.xlu0 %441
        %445 = vset.pattern.permute.xlu0 0
        %446 = vperm.xlu0 %445, %v250
        %v447 = vpop.permute.xlu0 %446
        %450 = vset.pattern.permute.xlu0 0
        %451 = vperm.xlu0 %450, %v251
        %v452 = vpop.permute.xlu0 %451
        %v454 = vmul.f32 %v430, %v437
        %v455 = vmul.f32 %v431, %v442
        %v456 = vmul.f32 %v432, %v447
        %v457 = vmul.f32 %v433, %v452
        %vm458 = vcmask 130048
        %v459 = vsel %vm458, %v454, 0.0
        %v460 = vsel %vm458, %v455, 0.0
        %v461 = vadd.f32 %v459, %v460
        %v462 = vsel %vm458, %v456, 0.0
        %v463 = vadd.f32 %v461, %v462
        %v464 = vsel %vm458, %v457, 0.0
        %v465 = vadd.f32 %v463, %v464
        %466 = vst.msk [vmem:[%s218] sm:$0xff] %vm458, %v465
        %s467 = sand.u32 %s119, 1
        %s468 = scalar_lea.sflag [#allocation3], %s467
        %s469 = sand.u32 %s119, 1
        %s470 = smul.addr %s469, 8
        %s471 = scalar_lea.vmem [#allocation2], %s470
        // Predicated region
        $region33: #{tpu_custom_call.1} parent=31 // pred_check
          %p472 = pneg %p129
        $region34: #{tpu_custom_call.1} parent=31 // pred_check_branch
          %474 = sbr.rel (%p472) target = $region36
        $region35: #{tpu_custom_call.1} parent=31 // pred_region
          %476 = vsyncadd %s468, 0
          %s477 = sadd.s32 %s22, %s21
          %s478 = smul.addr %s477, 8
          %s479 = scalar_lea.hbm %s3, %s478
          %s481 = sshll.u32 %s471, 4
          %s482 = int_to_ptr.vmem [resolvable:$true] %s481
          %s483 = sshll.u32 %s479, 4
          %s484 = int_to_ptr.hbm [resolvable:$true] %s483
          %486 = dma.vmem_to_hbm [thread:$0]  %s482, 128, %s484, %s468
        $region36: #{tpu_custom_call.1} parent=31 // pred_fallthru
          _
      $region32: #{tpu_custom_call.1} parent=5 // pred_fallthru
        _
      %p487 = scmp.le.s32.totalorder 2, %s12
      // Predicated region
      $region37: #{tpu_custom_call.1} parent=5 // pred_check
        %p488 = pneg %p487
      $region38: #{tpu_custom_call.1} parent=5 // pred_check_branch
        %490 = sbr.rel (%p488) target = $region40
      $region39: #{tpu_custom_call.1} parent=5 // pred_region
        %s491 = ssub.s32 %s12, 2
        // Predicated region
        $region41: #{tpu_custom_call.1} parent=39 // pred_check
          %p492 = pneg %p135
        $region42: #{tpu_custom_call.1} parent=39 // pred_check_branch
          %494 = sbr.rel (%p492) target = $region44
        $region43: #{tpu_custom_call.1} parent=39 // pred_region
          %s495 = sand.u32 %s120, 1
          %s496 = scalar_lea.sflag [#allocation3], %s495
          %s497 = sand.u32 %s120, 1
          %s498 = smul.addr %s497, 8
          %s499 = scalar_lea.vmem [#allocation2], %s498
          %501 = dma.done %s496, 128
        $region44: #{tpu_custom_call.1} parent=39 // pred_fallthru
          _
      $region40: #{tpu_custom_call.1} parent=5 // pred_fallthru
        _
    $region6: #{tpu_custom_call.1} parent=1 // loop_footer
      %s16 = sadd.s32 1, %s12
    $region7: #{tpu_custom_call.1} parent=1 // loop_footer_branch
      %11 = sbr.rel target = $region3
    $region8: #{tpu_custom_call.1} parent=1 // loop_exit
      _
    %502 = vsyncpa [#allocation3], 1
    %s503 = scalar_lea.sflag [#allocation3], 1
    %504 = vsyncpa %s503, 1

</llo_original>
